<compile_context>
chip_gen: v6e
topology: v6e:2x2x1
jax: 0.10.0
libtpu: 0.0.40
codegen_flags: <defaults>
</compile_context>

<pallas_src>
from functools import partial

import jax
import jax.numpy as jnp
from jax.experimental import pallas as pl
from jax.experimental.pallas import tpu as pltpu


def _round_up(x, m):
    return ((x + m - 1) // m) * m


def _classhead_kernel(x_ref, w_ref, b_ref, o_ref, *, c_out):
    # x_ref: (1, C_in, T)   activation tile (NCHW layout, HW tiled on lanes)
    # w_ref: (C_pad, C_in)  resident weight (rows zero-padded to a multiple of 8)
    # b_ref: (C_pad, 1)     resident bias
    # o_ref: (1, T, c_out)  output tile already in final NHWC-flattened layout
    acc = jnp.dot(w_ref[...], x_ref[0], preferred_element_type=jnp.float32)
    acc = acc + b_ref[...]                     # (C_pad, T), f32
    out_t = acc.T                              # (T, C_pad): small XLU transpose
    o_ref[0] = out_t[:, :c_out].astype(o_ref.dtype)


def _pick_tile(hw, n, c_in, itemsize, budget_bytes=4 * 1024 * 1024, max_tile=2048):
    """Lane-aligned HW tile size.

    Large enough to amortize the ~0.35us/step pipeline overhead, small enough
    that (a) one activation block stays under `budget_bytes` (v5e-safe when
    double-buffered) and (b) the lane-padded (t, 128) output block stays ~1 MiB.
    Also guarantees >= 2 grid iterations when possible so v7x's two TensorCores
    both get work and DMA/compute overlap exists even at batch 1.
    """
    cap = (budget_bytes // max(1, c_in * itemsize) // 128) * 128
    cap = max(128, min(cap, max_tile))
    t = min(cap, _round_up(hw, 128))
    if n * pl.cdiv(hw, t) < 2 and hw > 128:
        t = max(128, _round_up(pl.cdiv(hw, 2), 128))
    return t


def classhead_forward(x_nchw, weight, bias, num_anchors, *, t_hw=None,
                      vmem_limit_bytes=None):
    """x_nchw: (N, C_in, H, W); weight: (C_out, C_in) or (C_out, C_in, 1, 1);
    bias: (C_out,).  Returns (N, H*W*num_anchors, 2), matching the PyTorch module."""
    N, C_in, H, W = x_nchw.shape

    if weight.ndim == 4:  # raw PyTorch Conv2d weight (C_out, C_in, 1, 1)
        assert weight.shape[2:] == (1, 1), weight.shape
        weight = weight.reshape(weight.shape[0], weight.shape[1])
    C_out = weight.shape[0]
    assert weight.shape == (C_out, C_in), (weight.shape, C_in)
    assert bias.shape == (C_out,), bias.shape
    assert C_out == num_anchors * 2, (C_out, num_anchors)

    HW = H * W

    # Free reshape (NCHW is already contiguous over H, W).
    x3 = x_nchw.reshape(N, C_in, HW)

    # Pad the output-channel dim to a sublane multiple so the in-kernel matmul
    # result and its transpose are always (8k, 128m)-aligned. Tiny, one-time.
    C_pad = _round_up(C_out, 8)
    if C_pad != C_out:
        w2 = jnp.zeros((C_pad, C_in), dtype=weight.dtype).at[:C_out].set(weight)
        b2 = jnp.zeros((C_pad, 1), dtype=bias.dtype).at[:C_out, 0].set(bias)
    else:
        w2 = weight
        b2 = bias.reshape(C_out, 1)

    itemsize = jnp.dtype(x3.dtype).itemsize
    if t_hw is None:
        t_hw = _pick_tile(HW, N, C_in, itemsize)

    grid = (N, pl.cdiv(HW, t_hw))

    cost = pl.CostEstimate(
        flops=2 * N * HW * C_in * C_out,
        transcendentals=0,
        bytes_accessed=(N * HW * (C_in + C_out) * itemsize
                        + w2.size * jnp.dtype(w2.dtype).itemsize
                        + b2.size * jnp.dtype(b2.dtype).itemsize),
    )

    out3 = pl.pallas_call(
        partial(_classhead_kernel, c_out=C_out),
        out_shape=jax.ShapeDtypeStruct((N, HW, C_out), x3.dtype),
        grid_spec=pltpu.PrefetchScalarGridSpec(
            num_scalar_prefetch=0,
            grid=grid,
            in_specs=[
                pl.BlockSpec((1, C_in, t_hw), lambda n, j: (n, 0, j)),
                pl.BlockSpec((C_pad, C_in), lambda n, j: (0, 0)),   # resident
                pl.BlockSpec((C_pad, 1), lambda n, j: (0, 0)),      # resident
            ],
            out_specs=pl.BlockSpec((1, t_hw, C_out), lambda n, j: (n, j, 0)),
        ),
        compiler_params=pltpu.CompilerParams(
            dimension_semantics=("parallel", "parallel"),
            vmem_limit_bytes=vmem_limit_bytes,
        ),
        cost_estimate=cost,
    )(x3, w2, b2)

    # Only a free view remains: (N, HW, C_out) -> (N, HW*num_anchors, 2).
    return out3.reshape(N, HW * num_anchors, 2)


def reference_forward(x_nchw, weight, bias, num_anchors):
    # Pure-JAX reference of the PyTorch module (1x1 conv == channel matmul).
    N, C_in, H, W = x_nchw.shape
    out = jnp.einsum("nchw,oc->nohw", x_nchw, weight) + bias[None, :, None, None]
    out = jnp.transpose(out, (0, 2, 3, 1))
    return out.reshape(N, -1, 2)


if __name__ == "__main__":
    key = jax.random.PRNGKey(0)

    # --- Test 1: small shapes consistent with the module -------------------
    # HW = 256 -> one aligned 256-wide tile per image; grid (2, 1) = 2 parallel
    # iterations (megacore-friendly).
    k_x, k_w, k_b = jax.random.split(key, 3)
    N, C_in, H, W = 2, 32, 16, 16
    num_anchors = 3
    C_out = num_anchors * 2

    x = jax.random.normal(k_x, (N, C_in, H, W), dtype=jnp.float32)
    weight = jax.random.normal(k_w, (C_out, C_in), dtype=jnp.float32) * 0.05
    bias = jax.random.normal(k_b, (C_out,), dtype=jnp.float32) * 0.05

    out = jax.block_until_ready(classhead_forward(x, weight, bias, num_anchors))
    ref = reference_forward(x, weight, bias, num_anchors)
    assert out.shape == (N, H * W * num_anchors, 2), out.shape
    assert jnp.allclose(out, ref, atol=1e-4, rtol=1e-4), "mismatch vs reference (test 1)"

    # --- Test 2: ragged H*W (masked tail block) + raw 4-D conv weight ------
    # HW = 169 -> _pick_tile splits it into two 128-wide tiles (>=2 grid
    # iterations at batch 1); second block exercises the masked tail path.
    k_x2, k_w2, k_b2 = jax.random.split(jax.random.PRNGKey(1), 3)
    N2, C_in2, H2, W2 = 1, 16, 13, 13          # HW = 169, not a 128 multiple
    num_anchors2 = 2
    C_out2 = num_anchors2 * 2

    x2 = jax.random.normal(k_x2, (N2, C_in2, H2, W2), dtype=jnp.float32)
    w2_4d = jax.random.normal(k_w2, (C_out2, C_in2, 1, 1), dtype=jnp.float32) * 0.05
    b2 = jax.random.normal(k_b2, (C_out2,), dtype=jnp.float32) * 0.05

    out2 = jax.block_until_ready(
        classhead_forward(x2, w2_4d, b2, num_anchors2))
    ref2 = reference_forward(x2, w2_4d.reshape(C_out2, C_in2), b2, num_anchors2)
    assert out2.shape == (N2, H2 * W2 * num_anchors2, 2), out2.shape
    assert jnp.allclose(out2, ref2, atol=1e-4, rtol=1e-4), "mismatch vs reference (test 2)"

    print("KERNEL_OK")
</pallas_src>

<mosaic_0001>
module attributes {stable_mosaic.version = 11 : i64} {
  func.func @_classhead_kernel(%arg0: i32, %arg1: i32, %arg2: memref<1x32x256xf32, #tpu.memory_space<vmem>>, %arg3: memref<8x32xf32, #tpu.memory_space<vmem>>, %arg4: memref<8x1xf32, #tpu.memory_space<vmem>>, %arg5: memref<1x256x6xf32, #tpu.memory_space<vmem>>) attributes {dimension_semantics = [#tpu.dimension_semantics<parallel>, #tpu.dimension_semantics<parallel>], iteration_bounds = array<i64: 2, 1>, scalar_prefetch = 0 : i64, scratch_operands = 0 : i64, tpu.core_type = #tpu.core_type<tc>, window_params = [{transform_indices = @transform_0, window_bounds = array<i64: 1, 32, 256>}, {pipeline_mode = #tpu.pipeline_mode<synchronous>, transform_indices = @transform_1, window_bounds = array<i64: 8, 32>}, {pipeline_mode = #tpu.pipeline_mode<synchronous>, transform_indices = @transform_2, window_bounds = array<i64: 8, 1>}, {transform_indices = @transform_3, window_bounds = array<i64: 1, 256, 6>}]} {
    %c0 = arith.constant 0 : index
    %c0_0 = arith.constant 0 : index
    %0 = vector.load %arg3[%c0, %c0_0] : memref<8x32xf32, #tpu.memory_space<vmem>>, vector<8x32xf32>
    %c0_1 = arith.constant 0 : index
    %c0_2 = arith.constant 0 : index
    %c0_3 = arith.constant 0 : index
    %1 = vector.load %arg2[%c0_1, %c0_2, %c0_3] : memref<1x32x256xf32, #tpu.memory_space<vmem>>, vector<1x32x256xf32>
    %2 = vector.shape_cast %1 : vector<1x32x256xf32> to vector<32x256xf32>
    %cst = arith.constant dense<0.000000e+00> : vector<8x256xf32>
    %3 = tpu.matmul %0, %2, %cst {dimension_numbers = #tpu.dot_dimension_numbers<[1], [0], [0], [1], [0, 0, 1, 1], [], []>} : vector<8x32xf32>, vector<32x256xf32>, vector<8x256xf32> -> vector<8x256xf32>
    %c0_4 = arith.constant 0 : index
    %c0_5 = arith.constant 0 : index
    %4 = vector.load %arg4[%c0_4, %c0_5] : memref<8x1xf32, #tpu.memory_space<vmem>>, vector<8x1xf32>
    %5 = vector.broadcast %4 : vector<8x1xf32> to vector<8x256xf32>
    %6 = arith.addf %3, %5 : vector<8x256xf32>
    %7 = tpu.transpose %6, [1, 0] : vector<8x256xf32> -> vector<256x8xf32>
    %8 = vector.extract_strided_slice %7 {offsets = [0, 0], sizes = [256, 6], strides = [1, 1]} : vector<256x8xf32> to vector<256x6xf32>
    %c0_6 = arith.constant 0 : index
    %c0_7 = arith.constant 0 : index
    %c0_8 = arith.constant 0 : index
    %9 = vector.load %arg5[%c0_6, %c0_7, %c0_8] : memref<1x256x6xf32, #tpu.memory_space<vmem>>, vector<1x256x6xf32>
    %10 = vector.shape_cast %9 : vector<1x256x6xf32> to vector<256x6xf32>
    %11 = vector.shape_cast %8 : vector<256x6xf32> to vector<1x256x6xf32>
    tpu.vector_store %arg5[%c0_6, %c0_7, %c0_8], %11 {strides = array<i32>} : memref<1x256x6xf32, #tpu.memory_space<vmem>>, vector<1x256x6xf32>,
    return
  }
  func.func @transform_0(%arg0: i32, %arg1: i32) -> (i32, i32, i32) {
    %c0_i32 = arith.constant 0 : i32
    %c0_i32_0 = arith.constant 0 : i32
    return %arg0, %c0_i32, %arg1 : i32, i32, i32
  }
  func.func @transform_1(%arg0: i32, %arg1: i32) -> (i32, i32) {
    %c0_i32 = arith.constant 0 : i32
    %c0_i32_0 = arith.constant 0 : i32
    %c0_i32_1 = arith.constant 0 : i32
    return %c0_i32, %c0_i32_0 : i32, i32
  }
  func.func @transform_2(%arg0: i32, %arg1: i32) -> (i32, i32) {
    %c0_i32 = arith.constant 0 : i32
    %c0_i32_0 = arith.constant 0 : i32
    %c0_i32_1 = arith.constant 0 : i32
    return %c0_i32, %c0_i32_0 : i32, i32
  }
  func.func @transform_3(%arg0: i32, %arg1: i32) -> (i32, i32, i32) {
    %c0_i32 = arith.constant 0 : i32
    %c0_i32_0 = arith.constant 0 : i32
    return %arg0, %arg1, %c0_i32 : i32, i32, i32
  }
}

</mosaic_0001>

<llo_original>
// kernel: tpu_custom_call.1
$region0: #{tpu_custom_call.1}
  #allocation0 [shape = 'u32[]', space=smem, size = 0x4, offset = 0x4, fixed_abs, tag = 'smem constant byte address 0x4 - core index']
  #allocation1 [shape = 'u32[144,128]{1,0:T(1,128)}', space=vmem, size = 0x12000, scoped, tag = 'internal scratch']
  %s0 = inlined_call_operand.hbm [shape: f32[2,32,256], index: 0, kind: input, shape index: {}]
  %s1 = inlined_call_operand.vmem [shape: f32[8,32], index: 1, kind: input, shape index: {}]
  %s2 = inlined_call_operand.vmem [shape: f32[8,1], index: 2, kind: input, shape index: {}]
  %s3 = inlined_call_operand.vmem [shape: f32[2,256,6], index: 3, kind: output, shape index: {}]
  %s4 = sld [smem:[#allocation0]]
  $region49: #{tpu_custom_call.1} parent=0
    _
  %s6 = ssub.s32 1, %s4
  %s7 = scalar_select 0, %s6, %s4
  $region1: #{tpu_custom_call.1} parent=0
    #allocation2 [shape = 'u8[65536]{0}', space=vmem, size = 0x10000, scoped, tag = 'input window, operand 0']
    #allocation3 [shape = 's32[2]{0}', space=sflag, size = 0x8, scoped, tag = 'scoped memory for tpu_custom_call.1']
    %8 = vsyncpa [#allocation3], 0
    %s9 = scalar_lea.sflag [#allocation3], 1
    %10 = vsyncpa %s9, 0
    loop: start=0, step=1, limit=4
    $region2: #{tpu_custom_call.1} parent=1 // loop_pre_header
      _
    $region3: #{tpu_custom_call.1} parent=1 // loop_header
      %s12 = sphi 0, %s16
      %p13 = scmp.ge.s32.totalorder %s12, 4
      %s19 = sphi 0, %s31
      %s20 = sphi 0, %s27
      %s21 = sphi 0, %s19
      %s22 = sphi 0, %s20
      %s23 = sphi 0, %s21
      %s24 = sphi 0, %s22
      %s36 = sphi 0, %s38
      %s39 = sphi 0, %s36
      %s40 = sphi 0, %s39
      %s56 = sphi 0, %s40
      %s60 = sphi 0, %s60
      %s62 = sphi 0, %s60
      %s63 = sphi 0, %s62
      %s77 = sphi 0, %s63
      %s81 = sphi 0, %s81
      %s83 = sphi 0, %s81
      %s84 = sphi 0, %s83
      %s98 = sphi 0, %s84
      %s106 = sphi 0, %s108
      %s109 = sphi 0, %s106
      %s110 = sphi 0, %s109
      %s126 = sphi 0, %s110
    $region4: #{tpu_custom_call.1} parent=1 // loop_header_branch
      %15 = sbr.rel (%p13) target = $region8
    $region5: #{tpu_custom_call.1} parent=1 // loop_body
      %s17 = ssub.s32 %s12, 1
      %s18 = ssub.s32 %s12, 2
      %s25 = sadd.s32 1, %s20
      %p26 = scmp.ge.s32.totalorder %s25, 1
      %s27 = scalar_select %p26, 0, %s25
      %s28 = sadd.s32 1, %s19
      %s29 = scalar_select %p26, %s28, %s19
      %p30 = scmp.ge.s32.totalorder %s29, 2
      %s31 = scalar_select %p30, 0, %s29
      %s32 = ssub.s32 %s19, %s31
      %s33 = ssub.s32 %s20, %s27
      %s34 = sor.u32 %s32, %s33
      %p35 = scmp.eq.s32.totalorder %s34, 0
      %s37 = sadd.s32 %s36, 1
      %s38 = scalar_select %p35, %s36, %s37
      %p41 = pneg %p35
      %p42 = scmp.eq.s32.totalorder %s12, 1
      %p43 = por %p41, %p42
      %p44 = scmp.ne.s32.totalorder %s36, %s39
      %p45 = scmp.eq.s32.totalorder %s12, 0
      %p46 = por %p44, %p45
      %p47 = scmp.ne.s32.totalorder %s36, %s39
      %p48 = scmp.eq.s32.totalorder %s17, 1
      %p49 = por %p47, %p48
      %p50 = scmp.ne.s32.totalorder %s39, %s40
      %p51 = scmp.eq.s32.totalorder %s17, 0
      %p52 = por %p50, %p51
      %p53 = scmp.ne.s32.totalorder %s39, %s40
      %p54 = scmp.eq.s32.totalorder %s18, 1
      %p55 = por %p53, %p54
      %p57 = scmp.ne.s32.totalorder %s40, %s56
      %p58 = scmp.eq.s32.totalorder %s18, 0
      %p59 = por %p57, %p58
      %s61 = sadd.s32 %s60, 1
      %p64 = scmp.eq.s32.totalorder %s12, 1
      %p65 = scmp.ne.s32.totalorder %s60, %s62
      %p66 = scmp.eq.s32.totalorder %s12, 0
      %p67 = por %p65, %p66
      %p68 = scmp.ne.s32.totalorder %s60, %s62
      %p69 = scmp.eq.s32.totalorder %s17, 1
      %p70 = por %p68, %p69
      %p71 = scmp.ne.s32.totalorder %s62, %s63
      %p72 = scmp.eq.s32.totalorder %s17, 0
      %p73 = por %p71, %p72
      %p74 = scmp.ne.s32.totalorder %s62, %s63
      %p75 = scmp.eq.s32.totalorder %s18, 1
      %p76 = por %p74, %p75
      %p78 = scmp.ne.s32.totalorder %s63, %s77
      %p79 = scmp.eq.s32.totalorder %s18, 0
      %p80 = por %p78, %p79
      %s82 = sadd.s32 %s81, 1
      %p85 = scmp.eq.s32.totalorder %s12, 1
      %p86 = scmp.ne.s32.totalorder %s81, %s83
      %p87 = scmp.eq.s32.totalorder %s12, 0
      %p88 = por %p86, %p87
      %p89 = scmp.ne.s32.totalorder %s81, %s83
      %p90 = scmp.eq.s32.totalorder %s17, 1
      %p91 = por %p89, %p90
      %p92 = scmp.ne.s32.totalorder %s83, %s84
      %p93 = scmp.eq.s32.totalorder %s17, 0
      %p94 = por %p92, %p93
      %p95 = scmp.ne.s32.totalorder %s83, %s84
      %p96 = scmp.eq.s32.totalorder %s18, 1
      %p97 = por %p95, %p96
      %p99 = scmp.ne.s32.totalorder %s84, %s98
      %p100 = scmp.eq.s32.totalorder %s18, 0
      %p101 = por %p99, %p100
      %s102 = ssub.s32 %s19, %s31
      %s103 = ssub.s32 %s20, %s27
      %s104 = sor.u32 %s102, %s103
      %p105 = scmp.eq.s32.totalorder %s104, 0
      %s107 = sadd.s32 %s106, 1
      %s108 = scalar_select %p105, %s106, %s107
      %p111 = pneg %p105
      %p112 = scmp.eq.s32.totalorder %s12, 1
      %p113 = por %p111, %p112
      %p114 = scmp.ne.s32.totalorder %s106, %s109
      %p115 = scmp.eq.s32.totalorder %s12, 0
      %p116 = por %p114, %p115
      %p117 = scmp.ne.s32.totalorder %s106, %s109
      %p118 = scmp.eq.s32.totalorder %s17, 1
      %p119 = por %p117, %p118
      %p120 = scmp.ne.s32.totalorder %s109, %s110
      %p121 = scmp.eq.s32.totalorder %s17, 0
      %p122 = por %p120, %p121
      %p123 = scmp.ne.s32.totalorder %s109, %s110
      %p124 = scmp.eq.s32.totalorder %s18, 1
      %p125 = por %p123, %p124
      %p127 = scmp.ne.s32.totalorder %s110, %s126
      %p128 = scmp.eq.s32.totalorder %s18, 0
      %p129 = por %p127, %p128
      %p130 = scmp.le.s32.totalorder 1, %s12
      %p131 = scmp.lt.s32.totalorder %s12, 3
      %p132 = pnand %p130, %p131
      %p133 = pneg %p132
      // Predicated region
      $region9: #{tpu_custom_call.1} parent=5 // pred_check
        _
      $region10: #{tpu_custom_call.1} parent=5 // pred_check_branch
        %135 = sbr.rel (%p132) target = $region12
      $region11: #{tpu_custom_call.1} parent=5 // pred_region
        %s136 = ssub.s32 %s12, 1
        // Predicated region
        $region13: #{tpu_custom_call.1} parent=11 // pred_check
          %p137 = pneg %p73
        $region14: #{tpu_custom_call.1} parent=11 // pred_check_branch
          %139 = sbr.rel (%p137) target = $region16
        $region15: #{tpu_custom_call.1} parent=11 // pred_region
          _
        $region16: #{tpu_custom_call.1} parent=11 // pred_fallthru
          _
        // Predicated region
        $region17: #{tpu_custom_call.1} parent=11 // pred_check
          %p140 = pneg %p94
        $region18: #{tpu_custom_call.1} parent=11 // pred_check_branch
          %142 = sbr.rel (%p140) target = $region20
        $region19: #{tpu_custom_call.1} parent=11 // pred_region
          _
        $region20: #{tpu_custom_call.1} parent=11 // pred_fallthru
          _
      $region12: #{tpu_custom_call.1} parent=5 // pred_fallthru
        _
      %p143 = scmp.lt.s32.totalorder %s12, 2
      // Predicated region
      $region21: #{tpu_custom_call.1} parent=5 // pred_check
        %p144 = pneg %p143
      $region22: #{tpu_custom_call.1} parent=5 // pred_check_branch
        %146 = sbr.rel (%p144) target = $region24
      $region23: #{tpu_custom_call.1} parent=5 // pred_region
        // Predicated region
        $region25: #{tpu_custom_call.1} parent=23 // pred_check
          %p147 = pneg %p46
        $region26: #{tpu_custom_call.1} parent=23 // pred_check_branch
          %149 = sbr.rel (%p147) target = $region28
        $region27: #{tpu_custom_call.1} parent=23 // pred_region
          %s150 = sand.u32 %s36, 1
          %s151 = scalar_lea.sflag [#allocation3], %s150
          %s152 = sand.u32 %s36, 1
          %s153 = smul.addr %s152, 64
          %s154 = scalar_lea.vmem [#allocation2], %s153
          %s155 = smul.u32 2, %s20
          %s157 = ssub.s32 1024, 1024
          %158 = vsyncadd %s151, %s157
          %s159 = smul.addr %s19, 8
          %s160 = sadd.s32 %s155, %s159
          %s161 = smul.addr %s160, 128
          %s162 = scalar_lea.hbm %s0, %s161
          %s163 = sshll.u32 %s154, 4
          %s164 = int_to_ptr.vmem [resolvable:$true] %s163
          %169 = dma.hbm_to_vmem [thread:$0]  %s162, 1024, %s164, %s151, 256, 256, 16
        $region28: #{tpu_custom_call.1} parent=23 // pred_fallthru
          _
      $region24: #{tpu_custom_call.1} parent=5 // pred_fallthru
        _
      %p170 = scmp.le.s32.totalorder 1, %s12
      %p171 = scmp.lt.s32.totalorder %s12, 3
      %p172 = pnand %p170, %p171
      %p173 = pneg %p172
      // Predicated region
      $region29: #{tpu_custom_call.1} parent=5 // pred_check
        _
      $region30: #{tpu_custom_call.1} parent=5 // pred_check_branch
        %175 = sbr.rel (%p172) target = $region32
      $region31: #{tpu_custom_call.1} parent=5 // pred_region
        %s176 = ssub.s32 %s12, 1
        %s177 = sand.u32 %s39, 1
        %s178 = scalar_lea.sflag [#allocation3], %s177
        %s179 = sand.u32 %s39, 1
        %s180 = smul.addr %s179, 64
        %s181 = scalar_lea.vmem [#allocation2], %s180
        // Predicated region
        $region33: #{tpu_custom_call.1} parent=31 // pred_check
          %p182 = pneg %p52
        $region34: #{tpu_custom_call.1} parent=31 // pred_check_branch
          %184 = sbr.rel (%p182) target = $region36
        $region35: #{tpu_custom_call.1} parent=31 // pred_region
          %185 = dma.done %s178, 1024
        $region36: #{tpu_custom_call.1} parent=31 // pred_fallthru
          _
        %s186 = sand.u32 %s39, 1
        %s187 = scalar_lea.sflag [#allocation3], %s186
        %s188 = sand.u32 %s39, 1
        %s189 = smul.addr %s188, 64
        %s190 = scalar_lea.vmem [#allocation2], %s189
        %p191 = pneg %p52
        %p192 = pneg %p49
        %p193 = pneg %p73
        %p194 = pneg %p70
        %p195 = pneg %p94
        %p196 = pneg %p91
        %p197 = pneg %p122
        %p198 = pneg %p119
        %s199 = smul.u32 32, %s22
        %p200 = scmp.lt.s32.totalorder %s21, 1
        %s201 = scalar_select %p200, %s21, 1
        %p202 = scmp.lt.s32.totalorder %s199, 31
        %s203 = scalar_select %p202, %s199, 31
        %s204 = smul.addr %s201, 32
        %s205 = sadd.s32 %s203, %s204
        %s206 = smul.addr %s205, 8
        %s207 = scalar_lea.vmem %s3, %s206
        %s208 = smul.u32 2, %s22
        %s209 = smul.u32 32, %s22
        %p210 = scmp.lt.s32.totalorder %s21, 1
        %s211 = scalar_select %p210, %s21, 1
        %p212 = scmp.lt.s32.totalorder %s209, 31
        %s213 = scalar_select %p212, %s209, 31
        %s214 = smul.addr %s211, 32
        %s215 = sadd.s32 %s213, %s214
        %s216 = smul.addr %s215, 8
        %s217 = scalar_lea.vmem %s3, %s216
        %s218 = smul.u32 32, %s22
        %v219 = vld [vmem:[%s1] sm:$0xff]
        %v220 = vld [vmem:[%s181] sm:$0xff]
        %v221 = vld [vmem:[%s181 + $0x8] sm:$0xff]
        %v222 = vld [vmem:[%s181 + $0x10] sm:$0xff]
        %v223 = vld [vmem:[%s181 + $0x18] sm:$0xff]
        %v224 = vld [vmem:[%s181 + $0x20] sm:$0xff]
        %v225 = vld [vmem:[%s181 + $0x28] sm:$0xff]
        %v226 = vld [vmem:[%s181 + $0x30] sm:$0xff]
        %v227 = vld [vmem:[%s181 + $0x38] sm:$0xff]
        %v228 = vld [vmem:[%s2] sm:$0xff]
        %230 = vset.pattern.permute.xlu0 0
        %231 = vperm.xlu0 %230, %v228
        %v232 = vpop.permute.xlu0 %231
        %vm234 = vcmask 261120
        %v236 = vsel %vm234, %v219, 0
        %238 = vmatprep.subr.mxu0 0.0
        %239 = vmatpush1.msra.mxu0 0.0
        %240 = vmatprep.subr.mxu0 0.0
        %241 = vmatpush1.msra.mxu0 0.0
        %242 = vmatprep.subr.mxu0 0.0
        %243 = vmatpush1.msra.mxu0 0.0
        %244 = vmatprep.subr.mxu0 0.0
        %245 = vmatpush1.msra.mxu0 0.0
        %246 = vmatprep.subr.mxu0 0.0
        %247 = vmatpush1.msra.mxu0 0.0
        %248 = vmatprep.subr.mxu0 0.0
        %249 = vmatpush1.msra.mxu0 0.0
        %250 = vmatprep.subr.mxu0 0.0
        %251 = vmatpush1.msra.mxu0 0.0
        %252 = vmatprep.subr.mxu0 0.0
        %253 = vmatpush1.msra.mxu0 0.0
        %254 = vmatprep.subr.mxu0 0.0
        %255 = vmatpush1.msra.mxu0 0.0
        %256 = vmatprep.subr.mxu0 0.0
        %257 = vmatpush1.msra.mxu0 0.0
        %258 = vmatprep.subr.mxu0 0.0
        %259 = vmatpush1.msra.mxu0 0.0
        %260 = vmatprep.subr.mxu0 0.0
        %261 = vmatpush1.msra.mxu0 0.0
        %262 = vmatprep.subr.mxu0 %v227
        %263 = vmatpush1.msra.mxu0 %v226
        %264 = vmatprep.subr.mxu0 %v225
        %265 = vmatpush1.msra.mxu0 %v224
        %266 = vmatprep.subr.mxu0 %v223
        %267 = vmatpush1.msra.mxu0 %v222
        %268 = vmatprep.subr.mxu0 %v221
        %269 = vmatpush1.msra.mxu0 %v220
        %270 = vmatprep.subr.mxu0 0.0
        %271 = vmatpush2.msra.mxu0 0.0
        %272 = vmatprep.subr.mxu0 0.0
        %273 = vmatpush2.msra.mxu0 0.0
        %274 = vmatprep.subr.mxu0 0.0
        %275 = vmatpush2.msra.mxu0 0.0
        %276 = vmatprep.subr.mxu0 0.0
        %277 = vmatpush2.msra.mxu0 0.0
        %278 = vmatprep.subr.mxu0 0.0
        %279 = vmatpush2.msra.mxu0 0.0
        %280 = vmatprep.subr.mxu0 0.0
        %281 = vmatpush2.msra.mxu0 0.0
        %282 = vmatprep.subr.mxu0 0.0
        %283 = vmatpush2.msra.mxu0 0.0
        %284 = vmatprep.subr.mxu0 0.0
        %285 = vmatpush2.msra.mxu0 0.0
        %286 = vmatprep.subr.mxu0 0.0
        %287 = vmatpush2.msra.mxu0 0.0
        %288 = vmatprep.subr.mxu0 0.0
        %289 = vmatpush2.msra.mxu0 0.0
        %290 = vmatprep.subr.mxu0 0.0
        %291 = vmatpush2.msra.mxu0 0.0
        %292 = vmatprep.subr.mxu0 0.0
        %293 = vmatpush2.msra.mxu0 0.0
        %294 = vmatprep.subr.mxu0 0.0
        %295 = vmatpush2.msra.mxu0 0.0
        %296 = vmatprep.subr.mxu0 0.0
        %297 = vmatpush2.msra.mxu0 0.0
        %298 = vmatprep.subr.mxu0 0.0
        %299 = vmatpush2.msra.mxu0 0.0
        %300 = vmatprep.subr.mxu0 0.0
        %301 = vmatpush2.msra.mxu0 0.0
        %302 = vmatprep.mubr.f32.mxu0 0.0
        %303 = vmatmul.mubr.f32.gmra.mxu0 %v236
        %v304 = vpop.f32.mrf.mxu0
        %v305 = vadd.f32 %v232, %v304
        %v306 = vpop.f32.mrf.mxu0
        %v307 = vadd.f32 %v232, %v306
        %308 = vdwg.mxu0
        %309 = vxpose.xlu0.b32.start [1/16] %v305, 128
        %310 = vxpose.xlu0.b32.cont [2/16] 0.0, 128
        %311 = vxpose.xlu0.b32.cont [3/16] 0.0, 128
        %312 = vxpose.xlu0.b32.cont [4/16] 0.0, 128
        %313 = vxpose.xlu0.b32.cont [5/16] 0.0, 128
        %314 = vxpose.xlu0.b32.cont [6/16] 0.0, 128
        %315 = vxpose.xlu0.b32.cont [7/16] 0.0, 128
        %316 = vxpose.xlu0.b32.cont [8/16] 0.0, 128
        %317 = vxpose.xlu0.b32.cont [9/16] 0.0, 128
        %318 = vxpose.xlu0.b32.cont [10/16] 0.0, 128
        %319 = vxpose.xlu0.b32.cont [11/16] 0.0, 128
        %320 = vxpose.xlu0.b32.cont [12/16] 0.0, 128
        %321 = vxpose.xlu0.b32.cont [13/16] 0.0, 128
        %322 = vxpose.xlu0.b32.cont [14/16] 0.0, 128
        %323 = vxpose.xlu0.b32.cont [15/16] 0.0, 128
        %324 = vxpose.xlu0.b32.end [16/16] 0.0, 128
        %v325 = vpop.trf.xlu0
        %v326 = vpop.trf.xlu0
        %v327 = vpop.trf.xlu0
        %v328 = vpop.trf.xlu0
        %v329 = vpop.trf.xlu0
        %v330 = vpop.trf.xlu0
        %v331 = vpop.trf.xlu0
        %v332 = vpop.trf.xlu0
        %v333 = vpop.trf.xlu0
        %v334 = vpop.trf.xlu0
        %v335 = vpop.trf.xlu0
        %v336 = vpop.trf.xlu0
        %v337 = vpop.trf.xlu0
        %v338 = vpop.trf.xlu0
        %v339 = vpop.trf.xlu0
        %v340 = vpop.trf.xlu0
        %341 = vxpose.xlu0.b32.start [1/16] %v307, 128
        %342 = vxpose.xlu0.b32.cont [2/16] 0.0, 128
        %343 = vxpose.xlu0.b32.cont [3/16] 0.0, 128
        %344 = vxpose.xlu0.b32.cont [4/16] 0.0, 128
        %345 = vxpose.xlu0.b32.cont [5/16] 0.0, 128
        %346 = vxpose.xlu0.b32.cont [6/16] 0.0, 128
        %347 = vxpose.xlu0.b32.cont [7/16] 0.0, 128
        %348 = vxpose.xlu0.b32.cont [8/16] 0.0, 128
        %349 = vxpose.xlu0.b32.cont [9/16] 0.0, 128
        %350 = vxpose.xlu0.b32.cont [10/16] 0.0, 128
        %351 = vxpose.xlu0.b32.cont [11/16] 0.0, 128
        %352 = vxpose.xlu0.b32.cont [12/16] 0.0, 128
        %353 = vxpose.xlu0.b32.cont [13/16] 0.0, 128
        %354 = vxpose.xlu0.b32.cont [14/16] 0.0, 128
        %355 = vxpose.xlu0.b32.cont [15/16] 0.0, 128
        %356 = vxpose.xlu0.b32.end [16/16] 0.0, 128
        %v357 = vpop.trf.xlu0
        %v358 = vpop.trf.xlu0
        %v359 = vpop.trf.xlu0
        %v360 = vpop.trf.xlu0
        %v361 = vpop.trf.xlu0
        %v362 = vpop.trf.xlu0
        %v363 = vpop.trf.xlu0
        %v364 = vpop.trf.xlu0
        %v365 = vpop.trf.xlu0
        %v366 = vpop.trf.xlu0
        %v367 = vpop.trf.xlu0
        %v368 = vpop.trf.xlu0
        %v369 = vpop.trf.xlu0
        %v370 = vpop.trf.xlu0
        %v371 = vpop.trf.xlu0
        %v372 = vpop.trf.xlu0
        %vm373 = vcmask 48128
        %374 = vst.msk [vmem:[%s217] sm:$0xff] %vm373, %v325
        %375 = vst.msk [vmem:[%s217 + $0x8] sm:$0xff] %vm373, %v326
        %376 = vst.msk [vmem:[%s217 + $0x10] sm:$0xff] %vm373, %v327
        %377 = vst.msk [vmem:[%s217 + $0x18] sm:$0xff] %vm373, %v328
        %378 = vst.msk [vmem:[%s217 + $0x20] sm:$0xff] %vm373, %v329
        %379 = vst.msk [vmem:[%s217 + $0x28] sm:$0xff] %vm373, %v330
        %380 = vst.msk [vmem:[%s217 + $0x30] sm:$0xff] %vm373, %v331
        %381 = vst.msk [vmem:[%s217 + $0x38] sm:$0xff] %vm373, %v332
        %382 = vst.msk [vmem:[%s217 + $0x40] sm:$0xff] %vm373, %v333
        %383 = vst.msk [vmem:[%s217 + $0x48] sm:$0xff] %vm373, %v334
        %384 = vst.msk [vmem:[%s217 + $0x50] sm:$0xff] %vm373, %v335
        %385 = vst.msk [vmem:[%s217 + $0x58] sm:$0xff] %vm373, %v336
        %386 = vst.msk [vmem:[%s217 + $0x60] sm:$0xff] %vm373, %v337
        %387 = vst.msk [vmem:[%s217 + $0x68] sm:$0xff] %vm373, %v338
        %388 = vst.msk [vmem:[%s217 + $0x70] sm:$0xff] %vm373, %v339
        %389 = vst.msk [vmem:[%s217 + $0x78] sm:$0xff] %vm373, %v340
        %390 = vst.msk [vmem:[%s217 + $0x80] sm:$0xff] %vm373, %v357
        %391 = vst.msk [vmem:[%s217 + $0x88] sm:$0xff] %vm373, %v358
        %392 = vst.msk [vmem:[%s217 + $0x90] sm:$0xff] %vm373, %v359
        %393 = vst.msk [vmem:[%s217 + $0x98] sm:$0xff] %vm373, %v360
        %394 = vst.msk [vmem:[%s217 + $0xa0] sm:$0xff] %vm373, %v361
        %395 = vst.msk [vmem:[%s217 + $0xa8] sm:$0xff] %vm373, %v362
        %396 = vst.msk [vmem:[%s217 + $0xb0] sm:$0xff] %vm373, %v363
        %397 = vst.msk [vmem:[%s217 + $0xb8] sm:$0xff] %vm373, %v364
        %398 = vst.msk [vmem:[%s217 + $0xc0] sm:$0xff] %vm373, %v365
        %399 = vst.msk [vmem:[%s217 + $0xc8] sm:$0xff] %vm373, %v366
        %400 = vst.msk [vmem:[%s217 + $0xd0] sm:$0xff] %vm373, %v367
        %401 = vst.msk [vmem:[%s217 + $0xd8] sm:$0xff] %vm373, %v368
        %402 = vst.msk [vmem:[%s217 + $0xe0] sm:$0xff] %vm373, %v369
        %403 = vst.msk [vmem:[%s217 + $0xe8] sm:$0xff] %vm373, %v370
        %404 = vst.msk [vmem:[%s217 + $0xf0] sm:$0xff] %vm373, %v371
        %405 = vst.msk [vmem:[%s217 + $0xf8] sm:$0xff] %vm373, %v372
        %s406 = smul.u32 32, %s22
        %p407 = scmp.lt.s32.totalorder %s21, 1
        %s408 = scalar_select %p407, %s21, 1
        %p409 = scmp.lt.s32.totalorder %s406, 31
        %s410 = scalar_select %p409, %s406, 31
        %s411 = smul.addr %s408, 32
        %s412 = sadd.s32 %s410, %s411
        %s413 = smul.addr %s412, 8
        %s414 = scalar_lea.vmem %s3, %s413
        // Predicated region
        $region37: #{tpu_custom_call.1} parent=31 // pred_check
          %p415 = pneg %p119
        $region38: #{tpu_custom_call.1} parent=31 // pred_check_branch
          %417 = sbr.rel (%p415) target = $region40
        $region39: #{tpu_custom_call.1} parent=31 // pred_region
          %s418 = smul.u32 32, %s22
        $region40: #{tpu_custom_call.1} parent=31 // pred_fallthru
          _
      $region32: #{tpu_custom_call.1} parent=5 // pred_fallthru
        _
      %p419 = scmp.le.s32.totalorder 2, %s12
      // Predicated region
      $region41: #{tpu_custom_call.1} parent=5 // pred_check
        %p420 = pneg %p419
      $region42: #{tpu_custom_call.1} parent=5 // pred_check_branch
        %422 = sbr.rel (%p420) target = $region44
      $region43: #{tpu_custom_call.1} parent=5 // pred_region
        %s423 = ssub.s32 %s12, 2
        // Predicated region
        $region45: #{tpu_custom_call.1} parent=43 // pred_check
          %p424 = pneg %p125
        $region46: #{tpu_custom_call.1} parent=43 // pred_check_branch
          %426 = sbr.rel (%p424) target = $region48
        $region47: #{tpu_custom_call.1} parent=43 // pred_region
          %s427 = smul.u32 32, %s24
          %p428 = scmp.lt.s32.totalorder %s23, 1
          %s429 = scalar_select %p428, %s23, 1
          %p430 = scmp.lt.s32.totalorder %s427, 31
          %s431 = scalar_select %p430, %s427, 31
          %s432 = smul.addr %s429, 32
          %s433 = sadd.s32 %s431, %s432
          %s434 = smul.addr %s433, 8
          %s435 = scalar_lea.vmem %s3, %s434
        $region48: #{tpu_custom_call.1} parent=43 // pred_fallthru
          _
      $region44: #{tpu_custom_call.1} parent=5 // pred_fallthru
        _
    $region6: #{tpu_custom_call.1} parent=1 // loop_footer
      %s16 = sadd.s32 1, %s12
    $region7: #{tpu_custom_call.1} parent=1 // loop_footer_branch
      %11 = sbr.rel target = $region3
    $region8: #{tpu_custom_call.1} parent=1 // loop_exit
      _
    %436 = vsyncpa [#allocation3], 1
    %s437 = scalar_lea.sflag [#allocation3], 1
    %438 = vsyncpa %s437, 1

</llo_original>
